<compile_context>
chip_gen: v6e
topology: v6e:2x2x1
jax: 0.10.0
libtpu: 0.0.40
codegen_flags: <defaults>
</compile_context>

<pallas_src>
import functools

import jax
import jax.numpy as jnp
from jax.experimental import pallas as pl
from jax.experimental.pallas import tpu as pltpu

# Smallest normal f32: clamps m_p so 0 * log(0) never produces NaN when both
# softmax probabilities underflow to exactly zero.
_TINY = float(jnp.finfo(jnp.float32).tiny)


def _js_kernel(s_ref, t_ref, out_ref, acc_ref, *, length, tile):
    """One (n, j) grid step: a (C, tile) slab of logits for one image.

    Channels live on the sublane axis (block axis 0), spatial locations on the
    lane axis (block axis 1).  Softmax reductions run over axis 0; per-lane
    partials accumulate into acc_ref (shape (1, tile)); the cross-lane reduce
    happens only on the last j-step of each image.
    """
    j = pl.program_id(1)

    @pl.when(j == 0)
    def _():
        acc_ref[...] = jnp.zeros_like(acc_ref)

    s = s_ref[...].astype(jnp.float32)   # (C, tile)
    t = t_ref[...].astype(jnp.float32)

    # Channel softmax / log-softmax (reduce over the sublane/channel axis).
    s_max = jnp.max(s, axis=0, keepdims=True)            # (1, tile)
    t_max = jnp.max(t, axis=0, keepdims=True)
    s_shift = s - s_max
    t_shift = t - t_max
    s_exp = jnp.exp(s_shift)
    t_exp = jnp.exp(t_shift)
    s_sum = jnp.sum(s_exp, axis=0, keepdims=True)        # (1, tile)
    t_sum = jnp.sum(t_exp, axis=0, keepdims=True)

    # Per-column reciprocal + VPU multiply instead of a per-element divide
    # (cuts EUP work from ~5 to ~3 ops per element).
    s_p = s_exp * pl.reciprocal(s_sum)
    t_p = t_exp * pl.reciprocal(t_sum)
    s_logp = s_shift - jnp.log(s_sum)
    t_logp = t_shift - jnp.log(t_sum)

    # m = 0.5 * (p + q); clamp avoids log(0) -> -inf -> 0 * (-inf) = NaN.
    m_logp = jnp.log(jnp.maximum(0.5 * (s_p + t_p), _TINY))

    # Fused loss algebra: p*(log p - log m) + q*(log q - log m).
    integrand = s_p * (s_logp - m_logp) + t_p * (t_logp - m_logp)
    chan_sum = jnp.sum(integrand, axis=0, keepdims=True)  # (1, tile)

    if length % tile != 0:
        # Mask out-of-range lanes of the (padded) final block.
        lane = jax.lax.broadcasted_iota(jnp.int32, (1, tile), 1)
        valid = (j * tile + lane) < length
        chan_sum = jnp.where(valid, chan_sum, 0.0)

    acc_ref[...] += chan_sum

    @pl.when(j == pl.num_programs(1) - 1)
    def _():
        out_ref[...] = jnp.broadcast_to(0.5 * jnp.sum(acc_ref[...]), (1, 1, 1))


def _pick_lane_tile(num_channels, length, target_block_bytes=2 * 1024 * 1024):
    """Lane-axis tile, sized by a per-input VMEM byte budget (~2 MiB).

    Returns either the full spatial extent (single block) or a multiple of 128
    so the BlockSpec tiling constraint is always satisfied; the last partial
    block (if any) is masked inside the kernel.
    """
    budget = (target_block_bytes // (num_channels * 4)) // 128 * 128
    budget = max(128, budget)
    if length <= budget:
        return length          # single block == full array dim (always legal)
    return budget              # multiple of 128; tail block masked in-kernel


@functools.partial(jax.jit, static_argnames=("size_average",))
def js_single(pred_feas, target_feas, size_average=True):
    """JS divergence for one (student, teacher) NCHW feature pair."""
    N, C, H, W = pred_feas.shape
    assert target_feas.shape == (N, C, H, W)
    L = H * W

    # NCHW -> (N, C, H*W): contiguous reshape, no data movement.  bf16 inputs
    # are accepted as-is and upcast inside the kernel (halves HBM traffic).
    s3d = pred_feas.reshape(N, C, L)
    t3d = target_feas.reshape(N, C, L)

    T = _pick_lane_tile(C, L)
    steps = pl.cdiv(L, T)
    kernel = functools.partial(_js_kernel, length=L, tile=T)

    partials = pl.pallas_call(
        kernel,
        out_shape=jax.ShapeDtypeStruct((N, 1, 1), jnp.float32),
        grid_spec=pltpu.PrefetchScalarGridSpec(
            num_scalar_prefetch=0,
            grid=(N, steps),
            in_specs=[
                pl.BlockSpec((None, C, T), lambda n, j: (n, 0, j)),
                pl.BlockSpec((None, C, T), lambda n, j: (n, 0, j)),
            ],
            out_specs=pl.BlockSpec((1, 1, 1), lambda n, j: (n, 0, 0)),
            scratch_shapes=[pltpu.VMEM((1, T), jnp.float32)],
        ),
        compiler_params=pltpu.CompilerParams(
            # Per-image partials are independent -> leading axis "parallel"
            # (shards across both v7x TensorCores; harmless on v5e/v6e).
            dimension_semantics=("parallel", "arbitrary"),
            # Explicit budget: above v5e's 16 MiB scoped default, safely below
            # v7x's 64 MiB physical VMEM.  Blocks use ~9 MiB double-buffered.
            vmem_limit_bytes=32 * 1024 * 1024,
        ),
    )(s3d, t3d)

    loss = jnp.sum(partials)
    if size_average:
        loss = loss / jnp.float32(N * C * H * W)
    return loss


def js_loss(s_features, t_features, size_average=True):
    """Forward of JSLoss: sum of per-pair JS divergences over the feature list."""
    # TODO(synk): pairs sharing the same channel count could be concatenated
    # into a single pallas_call to amortize launch/pipeline-prologue overhead
    # for tiny feature maps.
    loss = jnp.float32(0.0)
    for s, t in zip(s_features, t_features):
        if s.shape != t.shape:
            # Mirrors the PyTorch module returning None on a shape mismatch.
            # (Eager-only behavior; not traceable under an outer jit.)
            return None
        loss = loss + js_single(s, t, size_average=size_average)
    return loss


def _reference_js(s_features, t_features, size_average=True):
    """Pure-JAX reference for correctness checking."""
    total = jnp.float32(0.0)
    for s, t in zip(s_features, t_features):
        s = s.astype(jnp.float32)
        t = t.astype(jnp.float32)
        s_p = jax.nn.softmax(s, axis=1)
        s_lp = jax.nn.log_softmax(s, axis=1)
        t_p = jax.nn.softmax(t, axis=1)
        t_lp = jax.nn.log_softmax(t, axis=1)
        m_p = 0.5 * (s_p + t_p)
        m_lp = jnp.log(m_p)
        l1 = jnp.sum(s_p * s_lp - s_p * m_lp)
        l2 = jnp.sum(t_p * t_lp - t_p * m_lp)
        l = 0.5 * l1 + 0.5 * l2
        if size_average:
            l = l / s.size
        total = total + l
    return total


if __name__ == "__main__":
    key = jax.random.PRNGKey(0)
    k1, k2, k3, k4 = jax.random.split(key, 4)

    # Two feature pairs (like two hook points in a distillation setup), NCHW.
    s_features = [
        jax.random.normal(k1, (2, 4, 16, 16), dtype=jnp.float32),
        jax.random.normal(k2, (2, 8, 8, 8), dtype=jnp.float32),
    ]
    t_features = [
        jax.random.normal(k3, (2, 4, 16, 16), dtype=jnp.float32),
        jax.random.normal(k4, (2, 8, 8, 8), dtype=jnp.float32),
    ]

    out = js_loss(s_features, t_features, size_average=True)
    out = jax.block_until_ready(out)

    ref = _reference_js(s_features, t_features, size_average=True)
    ref = jax.block_until_ready(ref)

    assert jnp.allclose(out, ref, rtol=1e-5, atol=1e-6), (out, ref)
    print("KERNEL_OK")
</pallas_src>

<mosaic_0001>
module attributes {stable_mosaic.version = 11 : i64} {
  func.func @_js_kernel(%arg0: i32, %arg1: i32, %arg2: memref<1x4x256xf32, #tpu.memory_space<vmem>>, %arg3: memref<1x4x256xf32, #tpu.memory_space<vmem>>, %arg4: memref<1x1x1xf32, #tpu.memory_space<vmem>>, %arg5: memref<1x256xf32, #tpu.memory_space<vmem>>) attributes {dimension_semantics = [#tpu.dimension_semantics<parallel>, #tpu.dimension_semantics<arbitrary>], iteration_bounds = array<i64: 2, 1>, scalar_prefetch = 0 : i64, scratch_operands = 1 : i64, tpu.core_type = #tpu.core_type<tc>, window_params = [{transform_indices = @transform_0, window_bounds = array<i64: 1, 4, 256>}, {transform_indices = @transform_1, window_bounds = array<i64: 1, 4, 256>}, {transform_indices = @transform_2, window_bounds = array<i64: 1, 1, 1>}]} {
    %c0_i32 = arith.constant 0 : i32
    %0 = arith.cmpi eq, %arg1, %c0_i32 : i32
    %1 = arith.extui %0 : i1 to i32
    %c0_i32_0 = arith.constant 0 : i32
    %2 = arith.cmpi ne, %1, %c0_i32_0 : i32
    scf.if %2 {
      %cst_18 = arith.constant 0.000000e+00 : f32
      %52 = vector.broadcast %cst_18 : f32 to vector<1x256xf32>
      %c0_19 = arith.constant 0 : index
      %c0_20 = arith.constant 0 : index
      %53 = vector.load %arg5[%c0_19, %c0_20] : memref<1x256xf32, #tpu.memory_space<vmem>>, vector<1x256xf32>
      tpu.vector_store %arg5[%c0_19, %c0_20], %52 {strides = array<i32>} : memref<1x256xf32, #tpu.memory_space<vmem>>, vector<1x256xf32>,
    } else {
    }
    %c0 = arith.constant 0 : index
    %c0_1 = arith.constant 0 : index
    %c0_2 = arith.constant 0 : index
    %3 = vector.load %arg2[%c0, %c0_1, %c0_2] : memref<1x4x256xf32, #tpu.memory_space<vmem>>, vector<1x4x256xf32>
    %4 = vector.shape_cast %3 : vector<1x4x256xf32> to vector<4x256xf32>
    %c0_3 = arith.constant 0 : index
    %c0_4 = arith.constant 0 : index
    %c0_5 = arith.constant 0 : index
    %5 = vector.load %arg3[%c0_3, %c0_4, %c0_5] : memref<1x4x256xf32, #tpu.memory_space<vmem>>, vector<1x4x256xf32>
    %6 = vector.shape_cast %5 : vector<1x4x256xf32> to vector<4x256xf32>
    %cst = arith.constant dense<0xFF800000> : vector<256xf32>
    %7 = vector.multi_reduction <maximumf>, %4, %cst [0] : vector<4x256xf32> to vector<256xf32>
    %8 = vector.shape_cast %7 : vector<256xf32> to vector<1x256xf32>
    %cst_6 = arith.constant dense<0xFF800000> : vector<256xf32>
    %9 = vector.multi_reduction <maximumf>, %6, %cst_6 [0] : vector<4x256xf32> to vector<256xf32>
    %10 = vector.shape_cast %9 : vector<256xf32> to vector<1x256xf32>
    %11 = vector.broadcast %8 : vector<1x256xf32> to vector<4x256xf32>
    %12 = arith.subf %4, %11 : vector<4x256xf32>
    %13 = vector.broadcast %10 : vector<1x256xf32> to vector<4x256xf32>
    %14 = arith.subf %6, %13 : vector<4x256xf32>
    %15 = math.exp %12 : vector<4x256xf32>
    %16 = math.exp %14 : vector<4x256xf32>
    %cst_7 = arith.constant dense<0.000000e+00> : vector<256xf32>
    %17 = vector.multi_reduction <add>, %15, %cst_7 [0] : vector<4x256xf32> to vector<256xf32>
    %18 = vector.shape_cast %17 : vector<256xf32> to vector<1x256xf32>
    %cst_8 = arith.constant dense<0.000000e+00> : vector<256xf32>
    %19 = vector.multi_reduction <add>, %16, %cst_8 [0] : vector<4x256xf32> to vector<256xf32>
    %20 = vector.shape_cast %19 : vector<256xf32> to vector<1x256xf32>
    %21 = tpu.reciprocal %18 : vector<1x256xf32> -> vector<1x256xf32>
    %22 = vector.broadcast %21 : vector<1x256xf32> to vector<4x256xf32>
    %23 = arith.mulf %15, %22 : vector<4x256xf32>
    %24 = tpu.reciprocal %20 : vector<1x256xf32> -> vector<1x256xf32>
    %25 = vector.broadcast %24 : vector<1x256xf32> to vector<4x256xf32>
    %26 = arith.mulf %16, %25 : vector<4x256xf32>
    %27 = math.log %18 : vector<1x256xf32>
    %28 = vector.broadcast %27 : vector<1x256xf32> to vector<4x256xf32>
    %29 = arith.subf %12, %28 : vector<4x256xf32>
    %30 = math.log %20 : vector<1x256xf32>
    %31 = vector.broadcast %30 : vector<1x256xf32> to vector<4x256xf32>
    %32 = arith.subf %14, %31 : vector<4x256xf32>
    %33 = arith.addf %23, %26 : vector<4x256xf32>
    %cst_9 = arith.constant 5.000000e-01 : f32
    %34 = vector.broadcast %cst_9 : f32 to vector<4x256xf32>
    %35 = arith.mulf %34, %33 : vector<4x256xf32>
    %cst_10 = arith.constant 1.17549435E-38 : f32
    %36 = vector.broadcast %cst_10 : f32 to vector<4x256xf32>
    %37 = arith.maximumf %35, %36 : vector<4x256xf32>
    %38 = math.log %37 : vector<4x256xf32>
    %39 = arith.subf %29, %38 : vector<4x256xf32>
    %40 = arith.mulf %23, %39 : vector<4x256xf32>
    %41 = arith.subf %32, %38 : vector<4x256xf32>
    %42 = arith.mulf %26, %41 : vector<4x256xf32>
    %43 = arith.addf %40, %42 : vector<4x256xf32>
    %cst_11 = arith.constant dense<0.000000e+00> : vector<256xf32>
    %44 = vector.multi_reduction <add>, %43, %cst_11 [0] : vector<4x256xf32> to vector<256xf32>
    %45 = vector.shape_cast %44 : vector<256xf32> to vector<1x256xf32>
    %c0_12 = arith.constant 0 : index
    %c0_13 = arith.constant 0 : index
    %46 = vector.load %arg5[%c0_12, %c0_13] : memref<1x256xf32, #tpu.memory_space<vmem>>, vector<1x256xf32>
    %47 = arith.addf %46, %45 : vector<1x256xf32>
    %c0_14 = arith.constant 0 : index
    %c0_15 = arith.constant 0 : index
    %48 = vector.load %arg5[%c0_14, %c0_15] : memref<1x256xf32, #tpu.memory_space<vmem>>, vector<1x256xf32>
    tpu.vector_store %arg5[%c0_14, %c0_15], %47 {strides = array<i32>} : memref<1x256xf32, #tpu.memory_space<vmem>>, vector<1x256xf32>,
    %c0_i32_16 = arith.constant 0 : i32
    %49 = arith.cmpi eq, %arg1, %c0_i32_16 : i32
    %50 = arith.extui %49 : i1 to i32
    %c0_i32_17 = arith.constant 0 : i32
    %51 = arith.cmpi ne, %50, %c0_i32_17 : i32
    scf.if %51 {
      %c0_18 = arith.constant 0 : index
      %c0_19 = arith.constant 0 : index
      %52 = vector.load %arg5[%c0_18, %c0_19] : memref<1x256xf32, #tpu.memory_space<vmem>>, vector<1x256xf32>
      %53 = vector.shape_cast %52 : vector<1x256xf32> to vector<1x1x256xf32>
      %cst_20 = arith.constant dense<0.000000e+00> : vector<1xf32>
      %54 = vector.multi_reduction <add>, %53, %cst_20 [1, 2] : vector<1x1x256xf32> to vector<1xf32>
      %55 = vector.shape_cast %54 : vector<1xf32> to vector<1x1x1xf32>
      %56 = vector.extract %55[0, 0, 0] : f32 from vector<1x1x1xf32>
      %cst_21 = arith.constant 5.000000e-01 : f32
      %57 = arith.mulf %cst_21, %56 : f32
      %58 = vector.broadcast %57 : f32 to vector<1x1x1xf32>
      %c0_22 = arith.constant 0 : index
      %c0_23 = arith.constant 0 : index
      %c0_24 = arith.constant 0 : index
      %59 = vector.load %arg4[%c0_22, %c0_23, %c0_24] : memref<1x1x1xf32, #tpu.memory_space<vmem>>, vector<1x1x1xf32>
      tpu.vector_store %arg4[%c0_22, %c0_23, %c0_24], %58 {strides = array<i32>} : memref<1x1x1xf32, #tpu.memory_space<vmem>>, vector<1x1x1xf32>,
    } else {
    }
    return
  }
  func.func @transform_0(%arg0: i32, %arg1: i32) -> (i32, i32, i32) {
    %c0_i32 = arith.constant 0 : i32
    %c0_i32_0 = arith.constant 0 : i32
    return %arg0, %c0_i32, %arg1 : i32, i32, i32
  }
  func.func @transform_1(%arg0: i32, %arg1: i32) -> (i32, i32, i32) {
    %c0_i32 = arith.constant 0 : i32
    %c0_i32_0 = arith.constant 0 : i32
    return %arg0, %c0_i32, %arg1 : i32, i32, i32
  }
  func.func @transform_2(%arg0: i32, %arg1: i32) -> (i32, i32, i32) {
    %c0_i32 = arith.constant 0 : i32
    %c0_i32_0 = arith.constant 0 : i32
    %c0_i32_1 = arith.constant 0 : i32
    return %arg0, %c0_i32, %c0_i32_0 : i32, i32, i32
  }
}

</mosaic_0001>

<llo_original>
// kernel: js_single.1
$region0: #{js_single.1}
  #allocation0 [shape = 'u32[]', space=smem, size = 0x4, offset = 0x4, fixed_abs, tag = 'smem constant byte address 0x4 - core index']
  #allocation1 [shape = 'u32[144,128]{1,0:T(1,128)}', space=vmem, size = 0x12000, scoped, tag = 'internal scratch']
  #allocation2 [shape = 'f32[1,256]{1,0:T(1,128)}', space=vmem, size = 0x400, scoped, tag = 'scratch operand']
  %s0 = inlined_call_operand.vmem [shape: f32[2,4,256], index: 0, kind: input, shape index: {}]
  %s1 = inlined_call_operand.vmem [shape: f32[2,4,256], index: 1, kind: input, shape index: {}]
  %s2 = inlined_call_operand.vmem [shape: f32[2,1,1], index: 2, kind: output, shape index: {}]
  %s3 = sld [smem:[#allocation0]]
  $region49: #{js_single.1} parent=0
    _
  %s5 = ssub.s32 1, %s3
  %s6 = scalar_select 0, %s5, %s3
  loop: start=0, step=1, limit=4
  $region2: #{js_single.1} parent=0 // loop_pre_header
    _
  $region3: #{js_single.1} parent=0 // loop_header
    %s8 = sphi 0, %s12
    %p9 = scmp.ge.s32.totalorder %s8, 4
    %s15 = sphi 0, %s27
    %s16 = sphi 0, %s23
    %s17 = sphi 0, %s15
    %s18 = sphi 0, %s16
    %s19 = sphi 0, %s17
    %s20 = sphi 0, %s18
    %s32 = sphi 0, %s34
    %s35 = sphi 0, %s32
    %s36 = sphi 0, %s35
    %s52 = sphi 0, %s36
    %s60 = sphi 0, %s62
    %s63 = sphi 0, %s60
    %s64 = sphi 0, %s63
    %s80 = sphi 0, %s64
    %s86 = sphi 0, %s88
    %s89 = sphi 0, %s86
    %s90 = sphi 0, %s89
    %s106 = sphi 0, %s90
  $region4: #{js_single.1} parent=0 // loop_header_branch
    %11 = sbr.rel (%p9) target = $region8
  $region5: #{js_single.1} parent=0 // loop_body
    %s13 = ssub.s32 %s8, 1
    %s14 = ssub.s32 %s8, 2
    %s21 = sadd.s32 1, %s16
    %p22 = scmp.ge.s32.totalorder %s21, 1
    %s23 = scalar_select %p22, 0, %s21
    %s24 = sadd.s32 1, %s15
    %s25 = scalar_select %p22, %s24, %s15
    %p26 = scmp.ge.s32.totalorder %s25, 2
    %s27 = scalar_select %p26, 0, %s25
    %s28 = ssub.s32 %s15, %s27
    %s29 = ssub.s32 %s16, %s23
    %s30 = sor.u32 %s28, %s29
    %p31 = scmp.eq.s32.totalorder %s30, 0
    %s33 = sadd.s32 %s32, 1
    %s34 = scalar_select %p31, %s32, %s33
    %p37 = pneg %p31
    %p38 = scmp.eq.s32.totalorder %s8, 1
    %p39 = por %p37, %p38
    %p40 = scmp.ne.s32.totalorder %s32, %s35
    %p41 = scmp.eq.s32.totalorder %s8, 0
    %p42 = por %p40, %p41
    %p43 = scmp.ne.s32.totalorder %s32, %s35
    %p44 = scmp.eq.s32.totalorder %s13, 1
    %p45 = por %p43, %p44
    %p46 = scmp.ne.s32.totalorder %s35, %s36
    %p47 = scmp.eq.s32.totalorder %s13, 0
    %p48 = por %p46, %p47
    %p49 = scmp.ne.s32.totalorder %s35, %s36
    %p50 = scmp.eq.s32.totalorder %s14, 1
    %p51 = por %p49, %p50
    %p53 = scmp.ne.s32.totalorder %s36, %s52
    %p54 = scmp.eq.s32.totalorder %s14, 0
    %p55 = por %p53, %p54
    %s56 = ssub.s32 %s15, %s27
    %s57 = ssub.s32 %s16, %s23
    %s58 = sor.u32 %s56, %s57
    %p59 = scmp.eq.s32.totalorder %s58, 0
    %s61 = sadd.s32 %s60, 1
    %s62 = scalar_select %p59, %s60, %s61
    %p65 = pneg %p59
    %p66 = scmp.eq.s32.totalorder %s8, 1
    %p67 = por %p65, %p66
    %p68 = scmp.ne.s32.totalorder %s60, %s63
    %p69 = scmp.eq.s32.totalorder %s8, 0
    %p70 = por %p68, %p69
    %p71 = scmp.ne.s32.totalorder %s60, %s63
    %p72 = scmp.eq.s32.totalorder %s13, 1
    %p73 = por %p71, %p72
    %p74 = scmp.ne.s32.totalorder %s63, %s64
    %p75 = scmp.eq.s32.totalorder %s13, 0
    %p76 = por %p74, %p75
    %p77 = scmp.ne.s32.totalorder %s63, %s64
    %p78 = scmp.eq.s32.totalorder %s14, 1
    %p79 = por %p77, %p78
    %p81 = scmp.ne.s32.totalorder %s64, %s80
    %p82 = scmp.eq.s32.totalorder %s14, 0
    %p83 = por %p81, %p82
    %s84 = ssub.s32 %s15, %s27
    %p85 = scmp.eq.s32.totalorder %s84, 0
    %s87 = sadd.s32 %s86, 1
    %s88 = scalar_select %p85, %s86, %s87
    %p91 = pneg %p85
    %p92 = scmp.eq.s32.totalorder %s8, 1
    %p93 = por %p91, %p92
    %p94 = scmp.ne.s32.totalorder %s86, %s89
    %p95 = scmp.eq.s32.totalorder %s8, 0
    %p96 = por %p94, %p95
    %p97 = scmp.ne.s32.totalorder %s86, %s89
    %p98 = scmp.eq.s32.totalorder %s13, 1
    %p99 = por %p97, %p98
    %p100 = scmp.ne.s32.totalorder %s89, %s90
    %p101 = scmp.eq.s32.totalorder %s13, 0
    %p102 = por %p100, %p101
    %p103 = scmp.ne.s32.totalorder %s89, %s90
    %p104 = scmp.eq.s32.totalorder %s14, 1
    %p105 = por %p103, %p104
    %p107 = scmp.ne.s32.totalorder %s90, %s106
    %p108 = scmp.eq.s32.totalorder %s14, 0
    %p109 = por %p107, %p108
    %p110 = scmp.le.s32.totalorder 1, %s8
    %p111 = scmp.lt.s32.totalorder %s8, 3
    %p112 = pnand %p110, %p111
    %p113 = pneg %p112
    // Predicated region
    $region9: #{js_single.1} parent=5 // pred_check
      _
    $region10: #{js_single.1} parent=5 // pred_check_branch
      %115 = sbr.rel (%p112) target = $region12
    $region11: #{js_single.1} parent=5 // pred_region
      %s116 = ssub.s32 %s8, 1
    $region12: #{js_single.1} parent=5 // pred_fallthru
      _
    %p117 = scmp.lt.s32.totalorder %s8, 2
    // Predicated region
    $region13: #{js_single.1} parent=5 // pred_check
      %p118 = pneg %p117
    $region14: #{js_single.1} parent=5 // pred_check_branch
      %120 = sbr.rel (%p118) target = $region16
    $region15: #{js_single.1} parent=5 // pred_region
      // Predicated region
      $region17: #{js_single.1} parent=15 // pred_check
        %p121 = pneg %p42
      $region18: #{js_single.1} parent=15 // pred_check_branch
        %123 = sbr.rel (%p121) target = $region20
      $region19: #{js_single.1} parent=15 // pred_region
        %s124 = smul.u32 2, %s16
        %p125 = scmp.lt.s32.totalorder %s15, 1
        %s126 = scalar_select %p125, %s15, 1
        %p127 = scmp.lt.s32.totalorder %s124, 1
        %s128 = scalar_select %p127, %s124, 1
        %s129 = smul.addr %s126, 2
        %s130 = sadd.s32 %s128, %s129
        %s131 = smul.addr %s130, 4
        %s132 = scalar_lea.vmem %s0, %s131
        %s133 = smul.u32 2, %s16
      $region20: #{js_single.1} parent=15 // pred_fallthru
        _
      // Predicated region
      $region21: #{js_single.1} parent=15 // pred_check
        %p134 = pneg %p70
      $region22: #{js_single.1} parent=15 // pred_check_branch
        %136 = sbr.rel (%p134) target = $region24
      $region23: #{js_single.1} parent=15 // pred_region
        %s137 = smul.u32 2, %s16
        %p138 = scmp.lt.s32.totalorder %s15, 1
        %s139 = scalar_select %p138, %s15, 1
        %p140 = scmp.lt.s32.totalorder %s137, 1
        %s141 = scalar_select %p140, %s137, 1
        %s142 = smul.addr %s139, 2
        %s143 = sadd.s32 %s141, %s142
        %s144 = smul.addr %s143, 4
        %s145 = scalar_lea.vmem %s1, %s144
        %s146 = smul.u32 2, %s16
      $region24: #{js_single.1} parent=15 // pred_fallthru
        _
    $region16: #{js_single.1} parent=5 // pred_fallthru
      _
    %p147 = scmp.le.s32.totalorder 1, %s8
    %p148 = scmp.lt.s32.totalorder %s8, 3
    %p149 = pnand %p147, %p148
    %p150 = pneg %p149
    // Predicated region
    $region25: #{js_single.1} parent=5 // pred_check
      _
    $region26: #{js_single.1} parent=5 // pred_check_branch
      %152 = sbr.rel (%p149) target = $region28
    $region27: #{js_single.1} parent=5 // pred_region
      %s153 = ssub.s32 %s8, 1
      %s154 = smul.u32 2, %s18
      %p155 = scmp.lt.s32.totalorder %s17, 1
      %s156 = scalar_select %p155, %s17, 1
      %p157 = scmp.lt.s32.totalorder %s154, 1
      %s158 = scalar_select %p157, %s154, 1
      %s159 = smul.addr %s156, 2
      %s160 = sadd.s32 %s158, %s159
      %s161 = smul.addr %s160, 4
      %s162 = scalar_lea.vmem %s0, %s161
      %p163 = pneg %p48
      %p164 = pneg %p45
      %s165 = smul.u32 2, %s18
      %p166 = scmp.lt.s32.totalorder %s17, 1
      %s167 = scalar_select %p166, %s17, 1
      %p168 = scmp.lt.s32.totalorder %s165, 1
      %s169 = scalar_select %p168, %s165, 1
      %s170 = smul.addr %s167, 2
      %s171 = sadd.s32 %s169, %s170
      %s172 = smul.addr %s171, 4
      %s173 = scalar_lea.vmem %s1, %s172
      %p174 = pneg %p76
      %p175 = pneg %p73
      %p176 = pneg %p102
      %p177 = pneg %p99
      %p178 = scmp.lt.s32.totalorder %s17, 1
      %s179 = scalar_select %p178, %s17, 1
      %s180 = scalar_lea.vmem %s2, %s179
      %s181 = smul.u32 2, %s18
      %p182 = scmp.lt.s32.totalorder %s17, 1
      %s183 = scalar_select %p182, %s17, 1
      %p184 = scmp.lt.s32.totalorder %s181, 1
      %s185 = scalar_select %p184, %s181, 1
      %s186 = smul.addr %s183, 2
      %s187 = sadd.s32 %s185, %s186
      %s188 = smul.addr %s187, 4
      %s189 = scalar_lea.vmem %s0, %s188
      %s190 = smul.u32 2, %s18
      %s191 = smul.u32 2, %s18
      %p192 = scmp.lt.s32.totalorder %s17, 1
      %s193 = scalar_select %p192, %s17, 1
      %p194 = scmp.lt.s32.totalorder %s191, 1
      %s195 = scalar_select %p194, %s191, 1
      %s196 = smul.addr %s193, 2
      %s197 = sadd.s32 %s195, %s196
      %s198 = smul.addr %s197, 4
      %s199 = scalar_lea.vmem %s1, %s198
      %s200 = smul.u32 2, %s18
      %p201 = scmp.lt.s32.totalorder %s17, 1
      %s202 = scalar_select %p201, %s17, 1
      %s203 = scalar_lea.vmem %s2, %s202
      %p204 = scmp.eq.s32.totalorder %s18, 0
      // Predicated region
      $region29: #{js_single.1} parent=27 // pred_check
        %p205 = pneg %p204
      $region30: #{js_single.1} parent=27 // pred_check_branch
        %207 = sbr.rel (%p205) target = $region32
      $region31: #{js_single.1} parent=27 // pred_region
        %v208 = vlaneseq
        %vm209 = vcmp.ge.s32.totalorder %v208, 0
        %vm210 = vcmp.lt.s32.totalorder %v208, 256
        %vm211 = vmand %vm209, %vm210
        %212 = vst.msk [vmem:[#allocation2] sm:$0x3] %vm211, 0.0
      $region32: #{js_single.1} parent=27 // pred_fallthru
        _
      %v213 = vld [vmem:[%s189] sm:$0xff]
      %v214 = vld [vmem:[%s199] sm:$0xff]
      %v216 = vcombine.high %v213, %v213
      %vm218 = vcmask 1043456
      %v219 = vsel %vm218, %v213, -inf
      %v220 = vrot.slane %v219, 4
      %v221 = vmax.f32 %v219, %v220
      %v222 = vrot.slane %v221, 2
      %v223 = vmax.f32 %v221, %v222
      %v224 = vrot.slane %v223, 1
      %v225 = vmax.f32 %v223, %v224
      %v226 = vsel %vm218, %v216, -inf
      %v227 = vrot.slane %v226, 4
      %v228 = vmax.f32 %v226, %v227
      %v229 = vrot.slane %v228, 2
      %v230 = vmax.f32 %v228, %v229
      %v231 = vrot.slane %v230, 1
      %v232 = vmax.f32 %v230, %v231
      %v234 = vcombine.high %v214, %v214
      %v236 = vsel %vm218, %v214, -inf
      %v237 = vrot.slane %v236, 4
      %v238 = vmax.f32 %v236, %v237
      %v239 = vrot.slane %v238, 2
      %v240 = vmax.f32 %v238, %v239
      %v241 = vrot.slane %v240, 1
      %v242 = vmax.f32 %v240, %v241
      %v243 = vsel %vm218, %v234, -inf
      %v244 = vrot.slane %v243, 4
      %v245 = vmax.f32 %v243, %v244
      %v246 = vrot.slane %v245, 2
      %v247 = vmax.f32 %v245, %v246
      %v248 = vrot.slane %v247, 1
      %v249 = vmax.f32 %v247, %v248
      %v252 = vcombine.low %v225, %v232
      %v254 = vsub.f32 %v213, %v252
      %v257 = vcombine.low %v242, %v249
      %v259 = vsub.f32 %v214, %v257
      %v260 = vmul.f32 %v254, 1.442695
      %v261 = vpow.pop %v260
      %v262 = vmul.f32 %v259, 1.442695
      %v263 = vpow.pop %v262
      %v265 = vcombine.high %v261, %v261
      %v267 = vsel %vm218, %v261, 0.0
      %v268 = vrot.slane %v267, 4
      %v269 = vadd.f32 %v267, %v268
      %v270 = vrot.slane %v269, 2
      %v271 = vadd.f32 %v269, %v270
      %v272 = vrot.slane %v271, 1
      %v273 = vadd.f32 %v271, %v272
      %v274 = vsel %vm218, %v265, 0.0
      %v275 = vrot.slane %v274, 4
      %v276 = vadd.f32 %v274, %v275
      %v277 = vrot.slane %v276, 2
      %v278 = vadd.f32 %v276, %v277
      %v279 = vrot.slane %v278, 1
      %v280 = vadd.f32 %v278, %v279
      %v282 = vcombine.high %v263, %v263
      %v284 = vsel %vm218, %v263, 0.0
      %v285 = vrot.slane %v284, 4
      %v286 = vadd.f32 %v284, %v285
      %v287 = vrot.slane %v286, 2
      %v288 = vadd.f32 %v286, %v287
      %v289 = vrot.slane %v288, 1
      %v290 = vadd.f32 %v288, %v289
      %v291 = vsel %vm218, %v282, 0.0
      %v292 = vrot.slane %v291, 4
      %v293 = vadd.f32 %v291, %v292
      %v294 = vrot.slane %v293, 2
      %v295 = vadd.f32 %v293, %v294
      %v296 = vrot.slane %v295, 1
      %v297 = vadd.f32 %v295, %v296
      %v298 = vrcp.pop %v273
      %v299 = vrcp.pop %v280
      %v302 = vcombine.low %v298, %v299
      %v304 = vmul.f32 %v261, %v302
      %v305 = vrcp.pop %v290
      %v306 = vrcp.pop %v297
      %v309 = vcombine.low %v305, %v306
      %v311 = vmul.f32 %v263, %v309
      %v312 = vlog2.pop %v273
      %v313 = vmul.f32 %v312, 0.6931472
      %v314 = vlog2.pop %v280
      %v315 = vmul.f32 %v314, 0.6931472
      %v318 = vcombine.low %v313, %v315
      %v320 = vsub.f32 %v254, %v318
      %v321 = vlog2.pop %v290
      %v322 = vmul.f32 %v321, 0.6931472
      %v323 = vlog2.pop %v297
      %v324 = vmul.f32 %v323, 0.6931472
      %v327 = vcombine.low %v322, %v324
      %v329 = vsub.f32 %v259, %v327
      %v330 = vadd.f32 %v304, %v311
      %v331 = vmul.f32 %v330, 0.5
      %v332 = vmax.f32 %v331, 1.1754944e-38
      %v333 = vlog2.pop %v332
      %v334 = vmul.f32 %v333, 0.6931472
      %v335 = vsub.f32 %v320, %v334
      %v336 = vmul.f32 %v304, %v335
      %v337 = vsub.f32 %v329, %v334
      %v338 = vmul.f32 %v311, %v337
      %v339 = vadd.f32 %v336, %v338
      %v341 = vcombine.high %v339, %v339
      %v343 = vsel %vm218, %v339, 0.0
      %v344 = vrot.slane %v343, 4
      %v345 = vadd.f32 %v343, %v344
      %v346 = vrot.slane %v345, 2
      %v347 = vadd.f32 %v345, %v346
      %v348 = vrot.slane %v347, 1
      %v349 = vadd.f32 %v347, %v348
      %v350 = vsel %vm218, %v341, 0.0
      %v351 = vrot.slane %v350, 4
      %v352 = vadd.f32 %v350, %v351
      %v353 = vrot.slane %v352, 2
      %v354 = vadd.f32 %v352, %v353
      %v355 = vrot.slane %v354, 1
      %v356 = vadd.f32 %v354, %v355
      %v357 = vld [vmem:[#allocation2] sm:$0x3]
      %v360 = vcombine.low %v349, %v356
      %v362 = vunpack.c.l.s4 1966171168
      %v363 = vunpack.c.0.s8 %v362
      %v364 = vlaneseq
      %v365 = vshrl.u32 %v364, 7
      %v366 = vsub.s32 %v363, %v365
      %v367 = vrot.slane %v360, %v366
      %v369 = vunpack.c.l.s4 1966171168
      %v370 = vunpack.c.0.s8 %v369
      %v371 = vlaneseq
      %v372 = vshrl.u32 %v371, 7
      %v373 = vsub.s32 %v370, %v372
      %v374 = vrot.slane %v367, %v373
      %v376 = vadd.f32 %v357, %v374
      %v377 = vlaneseq
      %vm378 = vcmp.ge.s32.totalorder %v377, 0
      %vm379 = vcmp.lt.s32.totalorder %v377, 256
      %vm380 = vmand %vm378, %vm379
      %381 = vst.msk [vmem:[#allocation2] sm:$0x3] %vm380, %v376
      // Predicated region
      $region33: #{js_single.1} parent=27 // pred_check
        %p382 = pneg %p204
      $region34: #{js_single.1} parent=27 // pred_check_branch
        %384 = sbr.rel (%p382) target = $region36
      $region35: #{js_single.1} parent=27 // pred_region
        %v385 = vld [vmem:[#allocation2] sm:$0x3]
        %v387 = vlaneseq
        %v388 = vshrl.u32 %v387, 7
        %v389 = vsub.s32 0, %v388
        %v390 = vrot.slane %v385, %v389
        %v391 = vlaneseq
        %v392 = vshrl.u32 %v391, 7
        %v393 = vsub.s32 1, %v392
        %v394 = vrot.slane %v385, %v393
        %vm397 = vcmask 1040384
        %v398 = vsel %vm397, %v390, 0.0
        %v399 = vsel %vm397, %v394, 0.0
        %v400 = vadd.f32 %v398, %v399
        %401 = vadd.xlane.f32.xlu0 %v400
        %v402 = vpop.xlane.xlu0 %401
        %v403 = vrot.slane %v402, 4
        %v404 = vadd.f32 %v402, %v403
        %v405 = vrot.slane %v404, 2
        %v406 = vadd.f32 %v404, %v405
        %v407 = vrot.slane %v406, 1
        %v408 = vadd.f32 %v406, %v407
        %s409 = vtos %v408
        %s410 = smul.f32 %s409, 0.5
        %v411 = vstv %s410
        %vm412 = vcmask 0
        %413 = vst.msk [vmem:[%s203] sm:$0x1] %vm412, %v411
      $region36: #{js_single.1} parent=27 // pred_fallthru
        _
      %p414 = scmp.lt.s32.totalorder %s17, 1
      %s415 = scalar_select %p414, %s17, 1
      %s416 = scalar_lea.vmem %s2, %s415
      // Predicated region
      $region37: #{js_single.1} parent=27 // pred_check
        %p417 = pneg %p99
      $region38: #{js_single.1} parent=27 // pred_check_branch
        %419 = sbr.rel (%p417) target = $region40
      $region39: #{js_single.1} parent=27 // pred_region
        _
      $region40: #{js_single.1} parent=27 // pred_fallthru
        _
    $region28: #{js_single.1} parent=5 // pred_fallthru
      _
    %p420 = scmp.le.s32.totalorder 2, %s8
    // Predicated region
    $region41: #{js_single.1} parent=5 // pred_check
      %p421 = pneg %p420
    $region42: #{js_single.1} parent=5 // pred_check_branch
      %423 = sbr.rel (%p421) target = $region44
    $region43: #{js_single.1} parent=5 // pred_region
      %s424 = ssub.s32 %s8, 2
      // Predicated region
      $region45: #{js_single.1} parent=43 // pred_check
        %p425 = pneg %p105
      $region46: #{js_single.1} parent=43 // pred_check_branch
        %427 = sbr.rel (%p425) target = $region48
      $region47: #{js_single.1} parent=43 // pred_region
        %p428 = scmp.lt.s32.totalorder %s19, 1
        %s429 = scalar_select %p428, %s19, 1
        %s430 = scalar_lea.vmem %s2, %s429
      $region48: #{js_single.1} parent=43 // pred_fallthru
        _
    $region44: #{js_single.1} parent=5 // pred_fallthru
      _
  $region6: #{js_single.1} parent=0 // loop_footer
    %s12 = sadd.s32 1, %s8
  $region7: #{js_single.1} parent=0 // loop_footer_branch
    %7 = sbr.rel target = $region3
  $region8: #{js_single.1} parent=0 // loop_exit
    _

</llo_original>
